<compile_context>
chip_gen: v7x
topology: tpu7x:2x2x1
jax: 0.10.0
libtpu: 0.0.40
codegen_flags: <defaults>
</compile_context>

<pallas_src>
import functools

import jax
import jax.numpy as jnp
from jax.experimental import pallas as pl
from jax.experimental.pallas import tpu as pltpu

NEG_SLOPE = 0.01  # nn.LeakyReLU default negative_slope


def _gdc_kernel(Nb, H, WC, C, d, x_ref, w_ref, b_ref, o_ref):
    """One grid step: Nb lane-dense images of shape (H, W*C)."""
    # Hoisted loads: 9 pre-masked tap weights (each (H, WC)) and the bias row.
    # Weights are already expanded/masked in the wrapper, so no per-tap
    # broadcast_in_dim is materialized inside the loop.
    w = [w_ref[t] for t in range(9)]
    b = b_ref[...]  # (1, WC); broadcast once per image into the bias add

    # roll shift s so that rolled[h] = x[h + (ki-1)*d]  (and same for lanes);
    # out-of-range source rows/lanes wrap around but are zeroed by the
    # pre-masked weights, so no in-kernel border handling is needed.
    s_row = {0: d % H, 1: 0, 2: (-d) % H}
    s_lane = {0: (d * C) % WC, 1: 0, 2: (-d * C) % WC}

    for i in range(Nb):
        x = x_ref[i]                         # (H, WC) lane-dense image
        acc = x * w[4] + b                   # center tap initializes acc (+ bias)
        for ki in range(3):
            # One row-roll per ki (2 total), reused for the three kj taps.
            base = x if s_row[ki] == 0 else pltpu.roll(x, s_row[ki], axis=0)
            for kj in range(3):
                idx = ki * 3 + kj
                if idx == 4:                 # center tap already in acc
                    continue
                t = base if s_lane[kj] == 0 else pltpu.roll(base, s_lane[kj], axis=1)
                acc = acc + t * w[idx]
        # LeakyReLU as a single vmax (0 < NEG_SLOPE < 1).
        o_ref[i] = jnp.maximum(acc, NEG_SLOPE * acc).astype(o_ref.dtype)


def _build_tap_weights(weight, dilation, H, W, C):
    """(C,1,3,3) depthwise weights -> (9, H, W*C) per-tap, lane-tiled, border-masked."""
    d = int(dilation)
    WC = W * C
    w_taps = weight.reshape(C, 9).T.astype(jnp.float32)       # (9, C), tap-major
    lane_w = jnp.arange(WC) // C                               # lane l -> column w
    rows = jnp.arange(H)
    taps = []
    for ki in range(3):
        for kj in range(3):
            idx = ki * 3 + kj
            dh = (ki - 1) * d
            dw = (kj - 1) * d
            row_ok = ((rows + dh >= 0) & (rows + dh < H)).astype(jnp.float32)      # (H,)
            lane_ok = ((lane_w + dw >= 0) & (lane_w + dw < W)).astype(jnp.float32)  # (WC,)
            w_lane = jnp.tile(w_taps[idx], (W,))                                    # (WC,)
            taps.append(row_ok[:, None] * (lane_ok * w_lane)[None, :])              # (H, WC)
    return jnp.stack(taps, axis=0)                              # (9, H, WC)


def group_dilated_conv_lane_dense(x, w_full, b_row, dilation, C, *, batch_block=1):
    """Core op on lane-dense activations.

    x      : (N, H, W*C) float32, lane index = w*C + c
    w_full : (9, H, W*C) pre-masked per-tap weights (from _build_tap_weights)
    b_row  : (1, W*C)    lane-tiled bias
    """
    N, H, WC = x.shape
    d = int(dilation)
    assert N % batch_block == 0, "batch_block must divide N"
    grid = (N // batch_block,)

    kernel = functools.partial(_gdc_kernel, batch_block, H, WC, C, d)

    return pl.pallas_call(
        kernel,
        out_shape=jax.ShapeDtypeStruct((N, H, WC), jnp.float32),
        grid=grid,
        in_specs=[
            # Activations: batch_block lane-dense images per step. Raise
            # batch_block for large N to amortize the ~600-cycle step overhead
            # (keep >= 2 grid steps on v7x so both TensorCores are fed, and
            # keep blocks within ~32 MiB scoped VMEM on v7x).
            pl.BlockSpec((batch_block, H, WC), lambda n: (n, 0, 0)),
            # Constant blocks (same index every step -> fetched once).
            pl.BlockSpec((9, H, WC), lambda n: (0, 0, 0)),
            pl.BlockSpec((1, WC), lambda n: (0, 0)),
        ],
        out_specs=pl.BlockSpec((batch_block, H, WC), lambda n: (n, 0, 0)),
        compiler_params=pltpu.CompilerParams(
            dimension_semantics=("parallel",)),  # batch images are independent
    )(x, w_full, b_row)


def group_dilated_convolution(x_nchw, weight, bias, dilation, *, batch_block=1):
    """Depthwise Conv2d(C, C, 3, dilation=d, padding='same', groups=C) + LeakyReLU.

    x_nchw : (N, C, H, W) float32  (PyTorch NCHW convention)
    weight : (C, 1, 3, 3) float32  (PyTorch depthwise weight layout)
    bias   : (C,)         float32

    Note: in a full model, keep activations in the lane-dense (N, H, W*C)
    layout across layers and call group_dilated_conv_lane_dense directly --
    the two transposes below are full HBM passes that roughly double the
    memory traffic of this HBM-bound op.
    """
    N, C, H, W = x_nchw.shape
    WC = W * C

    # NCHW -> NHWC -> lane-dense (N, H, W*C); lane index = w*C + c.
    x = jnp.transpose(x_nchw, (0, 2, 3, 1)).reshape(N, H, WC).astype(jnp.float32)

    w_full = _build_tap_weights(weight.astype(jnp.float32), dilation, H, W, C)
    b_row = jnp.tile(bias.astype(jnp.float32), (W,)).reshape(1, WC)

    y = group_dilated_conv_lane_dense(x, w_full, b_row, dilation, C,
                                      batch_block=batch_block)

    # lane-dense (N, H, W*C) -> NHWC -> NCHW
    return jnp.transpose(y.reshape(N, H, W, C), (0, 3, 1, 2))


if __name__ == "__main__":
    # channels=8, spatial=16, dilation=2  (W*C = 16*8 = 128 -> fully lane-dense)
    N, C, H, W, dilation = 2, 8, 16, 16, 2

    key = jax.random.PRNGKey(0)
    k_x, k_w, k_b = jax.random.split(key, 3)
    x_nchw = jax.random.normal(k_x, (N, C, H, W), dtype=jnp.float32)
    weight = (0.3 * jax.random.normal(k_w, (C, 1, 3, 3))).astype(jnp.float32)
    bias = (0.1 * jax.random.normal(k_b, (C,))).astype(jnp.float32)

    # batch_block=1 -> grid=(2,): two parallel steps keep both v7x TCs busy.
    y = group_dilated_convolution(x_nchw, weight, bias, dilation, batch_block=1)
    jax.block_until_ready(y)
    assert y.shape == (N, C, H, W)

    # Pure-JAX reference (depthwise dilated conv + LeakyReLU) for a sanity check.
    ref = jax.lax.conv_general_dilated(
        x_nchw, weight, window_strides=(1, 1),
        padding=((dilation, dilation), (dilation, dilation)),
        rhs_dilation=(dilation, dilation),
        dimension_numbers=("NCHW", "OIHW", "NCHW"),
        feature_group_count=C)
    ref = ref + bias.reshape(1, C, 1, 1)
    ref = jnp.where(ref >= 0.0, ref, NEG_SLOPE * ref)
    assert jnp.allclose(y, ref, atol=1e-4, rtol=1e-4), float(jnp.max(jnp.abs(y - ref)))

    print("KERNEL_OK")
</pallas_src>

<mosaic_0001>
module attributes {stable_mosaic.version = 11 : i64} {
  func.func @_gdc_kernel(%arg0: i32, %arg1: memref<1x16x128xf32, #tpu.memory_space<vmem>>, %arg2: memref<9x16x128xf32, #tpu.memory_space<vmem>>, %arg3: memref<1x128xf32, #tpu.memory_space<vmem>>, %arg4: memref<1x16x128xf32, #tpu.memory_space<vmem>>) attributes {dimension_semantics = [#tpu.dimension_semantics<parallel>], iteration_bounds = array<i64: 2>, scalar_prefetch = 0 : i64, scratch_operands = 0 : i64, tpu.core_type = #tpu.core_type<tc>, window_params = [{transform_indices = @transform_0, window_bounds = array<i64: 1, 16, 128>}, {pipeline_mode = #tpu.pipeline_mode<synchronous>, transform_indices = @transform_1, window_bounds = array<i64: 9, 16, 128>}, {pipeline_mode = #tpu.pipeline_mode<synchronous>, transform_indices = @transform_2, window_bounds = array<i64: 1, 128>}, {transform_indices = @transform_3, window_bounds = array<i64: 1, 16, 128>}]} {
    %c0 = arith.constant 0 : index
    %c0_0 = arith.constant 0 : index
    %c0_1 = arith.constant 0 : index
    %0 = vector.load %arg2[%c0, %c0_0, %c0_1] : memref<9x16x128xf32, #tpu.memory_space<vmem>>, vector<1x16x128xf32>
    %1 = vector.shape_cast %0 : vector<1x16x128xf32> to vector<16x128xf32>
    %c1 = arith.constant 1 : index
    %c0_2 = arith.constant 0 : index
    %c0_3 = arith.constant 0 : index
    %2 = vector.load %arg2[%c1, %c0_2, %c0_3] : memref<9x16x128xf32, #tpu.memory_space<vmem>>, vector<1x16x128xf32>
    %3 = vector.shape_cast %2 : vector<1x16x128xf32> to vector<16x128xf32>
    %c2 = arith.constant 2 : index
    %c0_4 = arith.constant 0 : index
    %c0_5 = arith.constant 0 : index
    %4 = vector.load %arg2[%c2, %c0_4, %c0_5] : memref<9x16x128xf32, #tpu.memory_space<vmem>>, vector<1x16x128xf32>
    %5 = vector.shape_cast %4 : vector<1x16x128xf32> to vector<16x128xf32>
    %c3 = arith.constant 3 : index
    %c0_6 = arith.constant 0 : index
    %c0_7 = arith.constant 0 : index
    %6 = vector.load %arg2[%c3, %c0_6, %c0_7] : memref<9x16x128xf32, #tpu.memory_space<vmem>>, vector<1x16x128xf32>
    %7 = vector.shape_cast %6 : vector<1x16x128xf32> to vector<16x128xf32>
    %c4 = arith.constant 4 : index
    %c0_8 = arith.constant 0 : index
    %c0_9 = arith.constant 0 : index
    %8 = vector.load %arg2[%c4, %c0_8, %c0_9] : memref<9x16x128xf32, #tpu.memory_space<vmem>>, vector<1x16x128xf32>
    %9 = vector.shape_cast %8 : vector<1x16x128xf32> to vector<16x128xf32>
    %c5 = arith.constant 5 : index
    %c0_10 = arith.constant 0 : index
    %c0_11 = arith.constant 0 : index
    %10 = vector.load %arg2[%c5, %c0_10, %c0_11] : memref<9x16x128xf32, #tpu.memory_space<vmem>>, vector<1x16x128xf32>
    %11 = vector.shape_cast %10 : vector<1x16x128xf32> to vector<16x128xf32>
    %c6 = arith.constant 6 : index
    %c0_12 = arith.constant 0 : index
    %c0_13 = arith.constant 0 : index
    %12 = vector.load %arg2[%c6, %c0_12, %c0_13] : memref<9x16x128xf32, #tpu.memory_space<vmem>>, vector<1x16x128xf32>
    %13 = vector.shape_cast %12 : vector<1x16x128xf32> to vector<16x128xf32>
    %c7 = arith.constant 7 : index
    %c0_14 = arith.constant 0 : index
    %c0_15 = arith.constant 0 : index
    %14 = vector.load %arg2[%c7, %c0_14, %c0_15] : memref<9x16x128xf32, #tpu.memory_space<vmem>>, vector<1x16x128xf32>
    %15 = vector.shape_cast %14 : vector<1x16x128xf32> to vector<16x128xf32>
    %c8 = arith.constant 8 : index
    %c0_16 = arith.constant 0 : index
    %c0_17 = arith.constant 0 : index
    %16 = vector.load %arg2[%c8, %c0_16, %c0_17] : memref<9x16x128xf32, #tpu.memory_space<vmem>>, vector<1x16x128xf32>
    %17 = vector.shape_cast %16 : vector<1x16x128xf32> to vector<16x128xf32>
    %c0_18 = arith.constant 0 : index
    %c0_19 = arith.constant 0 : index
    %18 = vector.load %arg3[%c0_18, %c0_19] : memref<1x128xf32, #tpu.memory_space<vmem>>, vector<1x128xf32>
    %c0_20 = arith.constant 0 : index
    %c0_21 = arith.constant 0 : index
    %c0_22 = arith.constant 0 : index
    %19 = vector.load %arg1[%c0_20, %c0_21, %c0_22] : memref<1x16x128xf32, #tpu.memory_space<vmem>>, vector<1x16x128xf32>
    %20 = vector.shape_cast %19 : vector<1x16x128xf32> to vector<16x128xf32>
    %21 = arith.mulf %20, %9 : vector<16x128xf32>
    %22 = vector.broadcast %18 : vector<1x128xf32> to vector<16x128xf32>
    %23 = arith.addf %21, %22 : vector<16x128xf32>
    %c2_i32 = arith.constant 2 : i32
    %24 = tpu.dynamic_rotate %20 by %c2_i32 dim 0 : vector<16x128xf32>, i32 -> vector<16x128xf32>
    %c16_i32 = arith.constant 16 : i32
    %25 = tpu.dynamic_rotate %24 by %c16_i32 dim 1 : vector<16x128xf32>, i32 -> vector<16x128xf32>
    %26 = arith.mulf %25, %1 : vector<16x128xf32>
    %27 = arith.addf %23, %26 : vector<16x128xf32>
    %28 = arith.mulf %24, %3 : vector<16x128xf32>
    %29 = arith.addf %27, %28 : vector<16x128xf32>
    %c112_i32 = arith.constant 112 : i32
    %30 = tpu.dynamic_rotate %24 by %c112_i32 dim 1 : vector<16x128xf32>, i32 -> vector<16x128xf32>
    %31 = arith.mulf %30, %5 : vector<16x128xf32>
    %32 = arith.addf %29, %31 : vector<16x128xf32>
    %c16_i32_23 = arith.constant 16 : i32
    %33 = tpu.dynamic_rotate %20 by %c16_i32_23 dim 1 : vector<16x128xf32>, i32 -> vector<16x128xf32>
    %34 = arith.mulf %33, %7 : vector<16x128xf32>
    %35 = arith.addf %32, %34 : vector<16x128xf32>
    %c112_i32_24 = arith.constant 112 : i32
    %36 = tpu.dynamic_rotate %20 by %c112_i32_24 dim 1 : vector<16x128xf32>, i32 -> vector<16x128xf32>
    %37 = arith.mulf %36, %11 : vector<16x128xf32>
    %38 = arith.addf %35, %37 : vector<16x128xf32>
    %c14_i32 = arith.constant 14 : i32
    %39 = tpu.dynamic_rotate %20 by %c14_i32 dim 0 : vector<16x128xf32>, i32 -> vector<16x128xf32>
    %c16_i32_25 = arith.constant 16 : i32
    %40 = tpu.dynamic_rotate %39 by %c16_i32_25 dim 1 : vector<16x128xf32>, i32 -> vector<16x128xf32>
    %41 = arith.mulf %40, %13 : vector<16x128xf32>
    %42 = arith.addf %38, %41 : vector<16x128xf32>
    %43 = arith.mulf %39, %15 : vector<16x128xf32>
    %44 = arith.addf %42, %43 : vector<16x128xf32>
    %c112_i32_26 = arith.constant 112 : i32
    %45 = tpu.dynamic_rotate %39 by %c112_i32_26 dim 1 : vector<16x128xf32>, i32 -> vector<16x128xf32>
    %46 = arith.mulf %45, %17 : vector<16x128xf32>
    %47 = arith.addf %44, %46 : vector<16x128xf32>
    %cst = arith.constant 0.00999999977 : f32
    %48 = vector.broadcast %cst : f32 to vector<16x128xf32>
    %49 = arith.mulf %48, %47 : vector<16x128xf32>
    %50 = arith.maximumf %47, %49 : vector<16x128xf32>
    %c0_27 = arith.constant 0 : index
    %c0_28 = arith.constant 0 : index
    %c0_29 = arith.constant 0 : index
    %51 = vector.load %arg4[%c0_27, %c0_28, %c0_29] : memref<1x16x128xf32, #tpu.memory_space<vmem>>, vector<1x16x128xf32>
    %52 = vector.shape_cast %51 : vector<1x16x128xf32> to vector<16x128xf32>
    %53 = vector.shape_cast %50 : vector<16x128xf32> to vector<1x16x128xf32>
    tpu.vector_store %arg4[%c0_27, %c0_28, %c0_29], %53 {strides = array<i32>} : memref<1x16x128xf32, #tpu.memory_space<vmem>>, vector<1x16x128xf32>,
    return
  }
  func.func @transform_0(%arg0: i32) -> (i32, i32, i32) {
    %c0_i32 = arith.constant 0 : i32
    %c0_i32_0 = arith.constant 0 : i32
    %c0_i32_1 = arith.constant 0 : i32
    return %arg0, %c0_i32, %c0_i32_0 : i32, i32, i32
  }
  func.func @transform_1(%arg0: i32) -> (i32, i32, i32) {
    %c0_i32 = arith.constant 0 : i32
    %c0_i32_0 = arith.constant 0 : i32
    %c0_i32_1 = arith.constant 0 : i32
    %c0_i32_2 = arith.constant 0 : i32
    return %c0_i32, %c0_i32_0, %c0_i32_1 : i32, i32, i32
  }
  func.func @transform_2(%arg0: i32) -> (i32, i32) {
    %c0_i32 = arith.constant 0 : i32
    %c0_i32_0 = arith.constant 0 : i32
    %c0_i32_1 = arith.constant 0 : i32
    return %c0_i32, %c0_i32_0 : i32, i32
  }
  func.func @transform_3(%arg0: i32) -> (i32, i32, i32) {
    %c0_i32 = arith.constant 0 : i32
    %c0_i32_0 = arith.constant 0 : i32
    %c0_i32_1 = arith.constant 0 : i32
    return %arg0, %c0_i32, %c0_i32_0 : i32, i32, i32
  }
}

</mosaic_0001>

<llo_original>
// kernel: tpu_custom_call.1
$region0: #{tpu_custom_call.1}
  #allocation0 [shape = 'u32[]', space=smem, size = 0x4, offset = 0x4, fixed_abs, tag = 'smem constant byte address 0x4 - core index']
  #allocation1 [shape = 'u32[144,128]{1,0:T(1,128)}', space=vmem, size = 0x12000, scoped, tag = 'internal scratch']
  %s0 = inlined_call_operand.hbm [shape: f32[2,16,128], index: 0, kind: input, shape index: {}]
  %s1 = inlined_call_operand.hbm [shape: f32[9,16,128], index: 1, kind: input, shape index: {}]
  %s2 = inlined_call_operand.vmem [shape: f32[1,128], index: 2, kind: input, shape index: {}]
  %s3 = inlined_call_operand.hbm [shape: f32[2,16,128], index: 3, kind: output, shape index: {}]
  %s4 = sld [smem:[#allocation0]]
  $region53: #{tpu_custom_call.1} parent=0
    _
  %s6 = ssub.s32 1, %s4
  %s7 = scalar_select 0, %s6, %s4
  $region1: #{tpu_custom_call.1} parent=0
    #allocation2 [shape = 'u8[16384]{0}', space=vmem, size = 0x4000, scoped, tag = 'input window, operand 0']
    #allocation3 [shape = 's32[2]{0}', space=sflag, size = 0x8, scoped, tag = 'scoped memory for tpu_custom_call.1']
    #allocation4 [shape = 's32[2]{0}', space=sflag, size = 0x8, scoped, tag = 'scoped memory for tpu_custom_call.1']
    #allocation5 [shape = 'u8[73728]{0}', space=vmem, size = 0x12000, scoped, tag = 'input window, operand 1, single buffered']
    #allocation6 [shape = 's32[1]{0}', space=sflag, size = 0x4, scoped, tag = 'scoped memory for tpu_custom_call.1']
    #allocation7 [shape = 'u8[16384]{0}', space=vmem, size = 0x4000, scoped, tag = 'output window, operand 0']
    %8 = vsyncpa [#allocation3], 0
    %s9 = scalar_lea.sflag [#allocation3], 1
    %10 = vsyncpa %s9, 0
    %11 = vsyncpa [#allocation6], 0
    %12 = vsyncpa [#allocation4], 0
    %s13 = scalar_lea.sflag [#allocation4], 1
    %14 = vsyncpa %s13, 0
    loop: start=0, step=1, limit=4
    $region2: #{tpu_custom_call.1} parent=1 // loop_pre_header
      _
    $region3: #{tpu_custom_call.1} parent=1 // loop_header
      %s16 = sphi 0, %s20
      %p17 = scmp.ge.s32.totalorder %s16, 4
      %s26 = sphi 0, %s28
      %s29 = sphi 0, %s26
      %s30 = sphi 0, %s29
      %s46 = sphi 0, %s30
      %s50 = sphi 0, %s50
      %s52 = sphi 0, %s50
      %s53 = sphi 0, %s52
      %s67 = sphi 0, %s53
      %s71 = sphi 0, %s71
      %s73 = sphi 0, %s71
      %s74 = sphi 0, %s73
      %s88 = sphi 0, %s74
      %s94 = sphi 0, %s96
      %s97 = sphi 0, %s94
      %s98 = sphi 0, %s97
      %s114 = sphi 0, %s98
    $region4: #{tpu_custom_call.1} parent=1 // loop_header_branch
      %19 = sbr.rel (%p17) target = $region8
    $region5: #{tpu_custom_call.1} parent=1 // loop_body
      %s21 = ssub.s32 %s16, 1
      %s22 = ssub.s32 %s16, 2
      %s23 = sadd.s32 %s16, 1
      %s24 = ssub.s32 %s16, %s23
      %p25 = scmp.eq.s32.totalorder %s24, 0
      %s27 = sadd.s32 %s26, 1
      %s28 = scalar_select %p25, %s26, %s27
      %p31 = pneg %p25
      %p32 = scmp.eq.s32.totalorder %s16, 1
      %p33 = por %p31, %p32
      %p34 = scmp.ne.s32.totalorder %s26, %s29
      %p35 = scmp.eq.s32.totalorder %s16, 0
      %p36 = por %p34, %p35
      %p37 = scmp.ne.s32.totalorder %s26, %s29
      %p38 = scmp.eq.s32.totalorder %s21, 1
      %p39 = por %p37, %p38
      %p40 = scmp.ne.s32.totalorder %s29, %s30
      %p41 = scmp.eq.s32.totalorder %s21, 0
      %p42 = por %p40, %p41
      %p43 = scmp.ne.s32.totalorder %s29, %s30
      %p44 = scmp.eq.s32.totalorder %s22, 1
      %p45 = por %p43, %p44
      %p47 = scmp.ne.s32.totalorder %s30, %s46
      %p48 = scmp.eq.s32.totalorder %s22, 0
      %p49 = por %p47, %p48
      %s51 = sadd.s32 %s50, 1
      %p54 = scmp.eq.s32.totalorder %s16, 1
      %p55 = scmp.ne.s32.totalorder %s50, %s52
      %p56 = scmp.eq.s32.totalorder %s16, 0
      %p57 = por %p55, %p56
      %p58 = scmp.ne.s32.totalorder %s50, %s52
      %p59 = scmp.eq.s32.totalorder %s21, 1
      %p60 = por %p58, %p59
      %p61 = scmp.ne.s32.totalorder %s52, %s53
      %p62 = scmp.eq.s32.totalorder %s21, 0
      %p63 = por %p61, %p62
      %p64 = scmp.ne.s32.totalorder %s52, %s53
      %p65 = scmp.eq.s32.totalorder %s22, 1
      %p66 = por %p64, %p65
      %p68 = scmp.ne.s32.totalorder %s53, %s67
      %p69 = scmp.eq.s32.totalorder %s22, 0
      %p70 = por %p68, %p69
      %s72 = sadd.s32 %s71, 1
      %p75 = scmp.eq.s32.totalorder %s16, 1
      %p76 = scmp.ne.s32.totalorder %s71, %s73
      %p77 = scmp.eq.s32.totalorder %s16, 0
      %p78 = por %p76, %p77
      %p79 = scmp.ne.s32.totalorder %s71, %s73
      %p80 = scmp.eq.s32.totalorder %s21, 1
      %p81 = por %p79, %p80
      %p82 = scmp.ne.s32.totalorder %s73, %s74
      %p83 = scmp.eq.s32.totalorder %s21, 0
      %p84 = por %p82, %p83
      %p85 = scmp.ne.s32.totalorder %s73, %s74
      %p86 = scmp.eq.s32.totalorder %s22, 1
      %p87 = por %p85, %p86
      %p89 = scmp.ne.s32.totalorder %s74, %s88
      %p90 = scmp.eq.s32.totalorder %s22, 0
      %p91 = por %p89, %p90
      %s92 = ssub.s32 %s16, %s23
      %p93 = scmp.eq.s32.totalorder %s92, 0
      %s95 = sadd.s32 %s94, 1
      %s96 = scalar_select %p93, %s94, %s95
      %p99 = pneg %p93
      %p100 = scmp.eq.s32.totalorder %s16, 1
      %p101 = por %p99, %p100
      %p102 = scmp.ne.s32.totalorder %s94, %s97
      %p103 = scmp.eq.s32.totalorder %s16, 0
      %p104 = por %p102, %p103
      %p105 = scmp.ne.s32.totalorder %s94, %s97
      %p106 = scmp.eq.s32.totalorder %s21, 1
      %p107 = por %p105, %p106
      %p108 = scmp.ne.s32.totalorder %s97, %s98
      %p109 = scmp.eq.s32.totalorder %s21, 0
      %p110 = por %p108, %p109
      %p111 = scmp.ne.s32.totalorder %s97, %s98
      %p112 = scmp.eq.s32.totalorder %s22, 1
      %p113 = por %p111, %p112
      %p115 = scmp.ne.s32.totalorder %s98, %s114
      %p116 = scmp.eq.s32.totalorder %s22, 0
      %p117 = por %p115, %p116
      %p118 = scmp.le.s32.totalorder 1, %s16
      %p119 = scmp.lt.s32.totalorder %s16, 3
      %p120 = pnand %p118, %p119
      %p121 = pneg %p120
      // Predicated region
      $region9: #{tpu_custom_call.1} parent=5 // pred_check
        _
      $region10: #{tpu_custom_call.1} parent=5 // pred_check_branch
        %123 = sbr.rel (%p120) target = $region12
      $region11: #{tpu_custom_call.1} parent=5 // pred_region
        %s124 = ssub.s32 %s16, 1
        // Predicated region
        $region13: #{tpu_custom_call.1} parent=11 // pred_check
          %p125 = pneg %p63
        $region14: #{tpu_custom_call.1} parent=11 // pred_check_branch
          %127 = sbr.rel (%p125) target = $region16
        $region15: #{tpu_custom_call.1} parent=11 // pred_region
          %s129 = ssub.s32 2304, 2304
          %130 = vsyncadd [#allocation6], %s129
          %s131 = sshll.u32 [#allocation5], 4
          %s132 = int_to_ptr.vmem [resolvable:$true] %s131
          %137 = dma.hbm_to_vmem [thread:$0]  %s1, 2304, %s132, [#allocation6], 128, 128, 8
        $region16: #{tpu_custom_call.1} parent=11 // pred_fallthru
          _
        // Predicated region
        $region17: #{tpu_custom_call.1} parent=11 // pred_check
          %p138 = pneg %p84
        $region18: #{tpu_custom_call.1} parent=11 // pred_check_branch
          %140 = sbr.rel (%p138) target = $region20
        $region19: #{tpu_custom_call.1} parent=11 // pred_region
          _
        $region20: #{tpu_custom_call.1} parent=11 // pred_fallthru
          _
      $region12: #{tpu_custom_call.1} parent=5 // pred_fallthru
        _
      %p141 = scmp.lt.s32.totalorder %s16, 2
      // Predicated region
      $region21: #{tpu_custom_call.1} parent=5 // pred_check
        %p142 = pneg %p141
      $region22: #{tpu_custom_call.1} parent=5 // pred_check_branch
        %144 = sbr.rel (%p142) target = $region24
      $region23: #{tpu_custom_call.1} parent=5 // pred_region
        // Predicated region
        $region25: #{tpu_custom_call.1} parent=23 // pred_check
          %p145 = pneg %p36
        $region26: #{tpu_custom_call.1} parent=23 // pred_check_branch
          %147 = sbr.rel (%p145) target = $region28
        $region27: #{tpu_custom_call.1} parent=23 // pred_region
          %s148 = sand.u32 %s26, 1
          %s149 = scalar_lea.sflag [#allocation3], %s148
          %s150 = sand.u32 %s26, 1
          %s151 = smul.addr %s150, 16
          %s152 = scalar_lea.vmem [#allocation2], %s151
          %s154 = ssub.s32 256, 256
          %155 = vsyncadd %s149, %s154
          %s156 = smul.addr %s16, 2
          %s157 = smul.addr %s156, 128
          %s158 = scalar_lea.hbm %s0, %s157
          %s159 = sshll.u32 %s152, 4
          %s160 = int_to_ptr.vmem [resolvable:$true] %s159
          %165 = dma.hbm_to_vmem [thread:$0]  %s158, 256, %s160, %s149, 128, 128, 8
        $region28: #{tpu_custom_call.1} parent=23 // pred_fallthru
          _
      $region24: #{tpu_custom_call.1} parent=5 // pred_fallthru
        _
      %p166 = scmp.le.s32.totalorder 1, %s16
      %p167 = scmp.lt.s32.totalorder %s16, 3
      %p168 = pnand %p166, %p167
      %p169 = pneg %p168
      // Predicated region
      $region29: #{tpu_custom_call.1} parent=5 // pred_check
        _
      $region30: #{tpu_custom_call.1} parent=5 // pred_check_branch
        %171 = sbr.rel (%p168) target = $region32
      $region31: #{tpu_custom_call.1} parent=5 // pred_region
        %s172 = ssub.s32 %s16, 1
        %s173 = sand.u32 %s29, 1
        %s174 = scalar_lea.sflag [#allocation3], %s173
        %s175 = sand.u32 %s29, 1
        %s176 = smul.addr %s175, 16
        %s177 = scalar_lea.vmem [#allocation2], %s176
        // Predicated region
        $region33: #{tpu_custom_call.1} parent=31 // pred_check
          %p178 = pneg %p42
        $region34: #{tpu_custom_call.1} parent=31 // pred_check_branch
          %180 = sbr.rel (%p178) target = $region36
        $region35: #{tpu_custom_call.1} parent=31 // pred_region
          %181 = dma.done %s174, 256
        $region36: #{tpu_custom_call.1} parent=31 // pred_fallthru
          _
        // Predicated region
        $region37: #{tpu_custom_call.1} parent=31 // pred_check
          %p182 = pneg %p63
        $region38: #{tpu_custom_call.1} parent=31 // pred_check_branch
          %184 = sbr.rel (%p182) target = $region40
        $region39: #{tpu_custom_call.1} parent=31 // pred_region
          %185 = dma.done [#allocation6], 2304
        $region40: #{tpu_custom_call.1} parent=31 // pred_fallthru
          _
        %s186 = sand.u32 %s29, 1
        %s187 = scalar_lea.sflag [#allocation3], %s186
        %s188 = sand.u32 %s29, 1
        %s189 = smul.addr %s188, 16
        %s190 = scalar_lea.vmem [#allocation2], %s189
        %p191 = pneg %p42
        %p192 = pneg %p39
        %p193 = pneg %p63
        %p194 = pneg %p60
        %p195 = pneg %p84
        %p196 = pneg %p81
        %p197 = pneg %p110
        %p198 = pneg %p107
        %s199 = sand.u32 %s97, 1
        %s200 = scalar_lea.sflag [#allocation4], %s199
        %s201 = sand.u32 %s97, 1
        %s202 = smul.addr %s201, 16
        %s203 = scalar_lea.vmem [#allocation7], %s202
        %v204 = vld [vmem:[#allocation5] sm:$0xff]
        %v205 = vld [vmem:[#allocation5 + $0x8] sm:$0xff]
        %s206 = scalar_lea.vmem [#allocation5], 16
        %v207 = vld [vmem:[%s206] sm:$0xff]
        %v208 = vld [vmem:[%s206 + $0x8] sm:$0xff]
        %s209 = scalar_lea.vmem [#allocation5], 32
        %v210 = vld [vmem:[%s209] sm:$0xff]
        %v211 = vld [vmem:[%s209 + $0x8] sm:$0xff]
        %s212 = scalar_lea.vmem [#allocation5], 48
        %v213 = vld [vmem:[%s212] sm:$0xff]
        %v214 = vld [vmem:[%s212 + $0x8] sm:$0xff]
        %s215 = scalar_lea.vmem [#allocation5], 64
        %v216 = vld [vmem:[%s215] sm:$0xff]
        %v217 = vld [vmem:[%s215 + $0x8] sm:$0xff]
        %s218 = scalar_lea.vmem [#allocation5], 80
        %v219 = vld [vmem:[%s218] sm:$0xff]
        %v220 = vld [vmem:[%s218 + $0x8] sm:$0xff]
        %s221 = scalar_lea.vmem [#allocation5], 96
        %v222 = vld [vmem:[%s221] sm:$0xff]
        %v223 = vld [vmem:[%s221 + $0x8] sm:$0xff]
        %s224 = scalar_lea.vmem [#allocation5], 112
        %v225 = vld [vmem:[%s224] sm:$0xff]
        %v226 = vld [vmem:[%s224 + $0x8] sm:$0xff]
        %s227 = scalar_lea.vmem [#allocation5], 128
        %v228 = vld [vmem:[%s227] sm:$0xff]
        %v229 = vld [vmem:[%s227 + $0x8] sm:$0xff]
        %v230 = vld [vmem:[%s2] sm:$0x1]
        %v231 = vld [vmem:[%s177] sm:$0xff]
        %v232 = vld [vmem:[%s177 + $0x8] sm:$0xff]
        %v233 = vmul.f32 %v231, %v216
        %v234 = vmul.f32 %v232, %v217
        %v236 = vlaneseq
        %v237 = vshrl.u32 %v236, 7
        %v238 = vsub.s32 0, %v237
        %v239 = vrot.slane %v230, %v238
        %v241 = vadd.f32 %v233, %v239
        %v242 = vadd.f32 %v234, %v239
        %v243 = vrot.slane %v231, 6
        %v244 = vrot.slane %v232, 6
        %v245 = vlaneseq
        %v246 = vshrl.u32 %v245, 7
        %vm247 = vcmp.lt.s32.totalorder %v246, 2
        %v248 = vsel %vm247, %v243, %v244
        %v249 = vsel %vm247, %v244, %v243
        %250 = vrot.lane.b32.xlu0 %v249, 16
        %v251 = vpop.permute.xlu0 %250
        %252 = vrot.lane.b32.xlu0 %v248, 16
        %v253 = vpop.permute.xlu0 %252
        %v254 = vmul.f32 %v251, %v204
        %v255 = vmul.f32 %v253, %v205
        %v256 = vadd.f32 %v241, %v254
        %v257 = vadd.f32 %v242, %v255
        %v258 = vmul.f32 %v249, %v207
        %v259 = vmul.f32 %v248, %v208
        %v260 = vadd.f32 %v256, %v258
        %v261 = vadd.f32 %v257, %v259
        %262 = vrot.lane.b32.xlu0 %v249, 112
        %v263 = vpop.permute.xlu0 %262
        %264 = vrot.lane.b32.xlu0 %v248, 112
        %v265 = vpop.permute.xlu0 %264
        %v266 = vmul.f32 %v263, %v210
        %v267 = vmul.f32 %v265, %v211
        %v268 = vadd.f32 %v260, %v266
        %v269 = vadd.f32 %v261, %v267
        %270 = vrot.lane.b32.xlu0 %v231, 16
        %v271 = vpop.permute.xlu0 %270
        %272 = vrot.lane.b32.xlu0 %v232, 16
        %v273 = vpop.permute.xlu0 %272
        %v274 = vmul.f32 %v271, %v213
        %v275 = vmul.f32 %v273, %v214
        %v276 = vadd.f32 %v268, %v274
        %v277 = vadd.f32 %v269, %v275
        %278 = vrot.lane.b32.xlu0 %v231, 112
        %v279 = vpop.permute.xlu0 %278
        %280 = vrot.lane.b32.xlu0 %v232, 112
        %v281 = vpop.permute.xlu0 %280
        %v282 = vmul.f32 %v279, %v219
        %v283 = vmul.f32 %v281, %v220
        %v284 = vadd.f32 %v276, %v282
        %v285 = vadd.f32 %v277, %v283
        %v286 = vrot.slane %v231, 2
        %v287 = vrot.slane %v232, 2
        %vm288 = vcmp.lt.s32.totalorder %v246, 6
        %v289 = vsel %vm288, %v286, %v287
        %v290 = vsel %vm288, %v287, %v286
        %291 = vrot.lane.b32.xlu0 %v289, 16
        %v292 = vpop.permute.xlu0 %291
        %293 = vrot.lane.b32.xlu0 %v290, 16
        %v294 = vpop.permute.xlu0 %293
        %v295 = vmul.f32 %v292, %v222
        %v296 = vmul.f32 %v294, %v223
        %v297 = vadd.f32 %v284, %v295
        %v298 = vadd.f32 %v285, %v296
        %v299 = vmul.f32 %v289, %v225
        %v300 = vmul.f32 %v290, %v226
        %v301 = vadd.f32 %v297, %v299
        %v302 = vadd.f32 %v298, %v300
        %303 = vrot.lane.b32.xlu0 %v289, 112
        %v304 = vpop.permute.xlu0 %303
        %305 = vrot.lane.b32.xlu0 %v290, 112
        %v306 = vpop.permute.xlu0 %305
        %v307 = vmul.f32 %v304, %v228
        %v308 = vmul.f32 %v306, %v229
        %v309 = vadd.f32 %v301, %v307
        %v310 = vadd.f32 %v302, %v308
        %v311 = vmul.f32 %v309, 0.01
        %v312 = vmul.f32 %v310, 0.01
        %v313 = vmax.f32 %v309, %v311
        %v314 = vmax.f32 %v310, %v312
        %315 = vst [vmem:[%s203] sm:$0xff] %v313
        %316 = vst [vmem:[%s203 + $0x8] sm:$0xff] %v314
        %s317 = sand.u32 %s97, 1
        %s318 = scalar_lea.sflag [#allocation4], %s317
        %s319 = sand.u32 %s97, 1
        %s320 = smul.addr %s319, 16
        %s321 = scalar_lea.vmem [#allocation7], %s320
        // Predicated region
        $region41: #{tpu_custom_call.1} parent=31 // pred_check
          %p322 = pneg %p107
        $region42: #{tpu_custom_call.1} parent=31 // pred_check_branch
          %324 = sbr.rel (%p322) target = $region44
        $region43: #{tpu_custom_call.1} parent=31 // pred_region
          %s326 = ssub.s32 256, 256
          %327 = vsyncadd %s318, %s326
          %s328 = smul.addr %s21, 2
          %s329 = smul.addr %s328, 128
          %s330 = scalar_lea.hbm %s3, %s329
          %s331 = sshll.u32 %s321, 4
          %s332 = int_to_ptr.vmem [resolvable:$true] %s331
          %337 = dma.vmem_to_hbm [thread:$0]  %s332, 256, %s330, %s318, 128, 128, 8
        $region44: #{tpu_custom_call.1} parent=31 // pred_fallthru
          _
      $region32: #{tpu_custom_call.1} parent=5 // pred_fallthru
        _
      %p338 = scmp.le.s32.totalorder 2, %s16
      // Predicated region
      $region45: #{tpu_custom_call.1} parent=5 // pred_check
        %p339 = pneg %p338
      $region46: #{tpu_custom_call.1} parent=5 // pred_check_branch
        %341 = sbr.rel (%p339) target = $region48
      $region47: #{tpu_custom_call.1} parent=5 // pred_region
        %s342 = ssub.s32 %s16, 2
        // Predicated region
        $region49: #{tpu_custom_call.1} parent=47 // pred_check
          %p343 = pneg %p113
        $region50: #{tpu_custom_call.1} parent=47 // pred_check_branch
          %345 = sbr.rel (%p343) target = $region52
        $region51: #{tpu_custom_call.1} parent=47 // pred_region
          %s346 = sand.u32 %s98, 1
          %s347 = scalar_lea.sflag [#allocation4], %s346
          %s348 = sand.u32 %s98, 1
          %s349 = smul.addr %s348, 16
          %s350 = scalar_lea.vmem [#allocation7], %s349
          %351 = dma.done %s347, 256
        $region52: #{tpu_custom_call.1} parent=47 // pred_fallthru
          _
      $region48: #{tpu_custom_call.1} parent=5 // pred_fallthru
        _
    $region6: #{tpu_custom_call.1} parent=1 // loop_footer
      %s20 = sadd.s32 1, %s16
    $region7: #{tpu_custom_call.1} parent=1 // loop_footer_branch
      %15 = sbr.rel target = $region3
    $region8: #{tpu_custom_call.1} parent=1 // loop_exit
      _
    %352 = vsyncpa [#allocation3], 1
    %s353 = scalar_lea.sflag [#allocation3], 1
    %354 = vsyncpa %s353, 1
    %355 = vsyncpa [#allocation6], 1
    %356 = vsyncpa [#allocation4], 1
    %s357 = scalar_lea.sflag [#allocation4], 1
    %358 = vsyncpa %s357, 1

</llo_original>
